<compile_context>
chip_gen: v7x
topology: tpu7x:2x2x1
jax: 0.10.0
libtpu: 0.0.40
codegen_flags: <defaults>
</compile_context>

<pallas_src>
import functools

import jax
import jax.numpy as jnp
from jax.experimental import pallas as pl
from jax.experimental.pallas import tpu as pltpu


def _ce_dice_kernel(x_ref, t_ref, out_ref,
                    inter_acc, pred_acc, label_acc, ce_acc,
                    *, num_classes, hw):
    i = pl.program_id(1)                       # pixel-tile index (reduction axis)

    @pl.when(i == 0)
    def _init():
        inter_acc[...] = jnp.zeros_like(inter_acc)
        pred_acc[...] = jnp.zeros_like(pred_acc)
        label_acc[...] = jnp.zeros_like(label_acc)
        ce_acc[...] = jnp.zeros_like(ce_acc)

    logits = x_ref[...].astype(jnp.float32)    # (C, TP), cast to f32 in-kernel
    tgt = t_ref[...]                           # (1, TP) int32

    C, TP = logits.shape
    class_ids = jax.lax.broadcasted_iota(jnp.int32, (C, TP), 0)

    # ---- tail mask: lanes past the real pixel count contribute nothing ----
    lane = jax.lax.broadcasted_iota(jnp.int32, (1, TP), 1) + i * TP
    valid = lane < hw                          # (1, TP) bool

    # ---- cross entropy: ce = lse - z[target]  (no logp materialization) ----
    m = jnp.max(logits, axis=0, keepdims=True)                 # (1, TP)
    z = logits - m
    lse = jnp.log(jnp.sum(jnp.exp(z), axis=0, keepdims=True))  # (1, TP)
    tgt_m = jnp.where(valid, tgt, -1)                          # OOB sentinel
    onehot = class_ids == tgt_m                                # (C, TP)
    picked_z = jnp.sum(jnp.where(onehot, z, 0.0), axis=0, keepdims=True)
    ce_px = jnp.where(valid, lse - picked_z, 0.0)
    ce_acc[...] = ce_acc[...] + jnp.sum(ce_px)

    # ---- argmax over classes, reusing m (first-occurrence tie-break) ----
    is_max = logits == m
    pred = jnp.min(jnp.where(is_max, class_ids, num_classes),
                   axis=0, keepdims=True)                      # (1, TP)
    pred_m = jnp.where(valid, pred, -1)
    pred_mat = class_ids == pred_m                             # (C, TP)

    # ---- per-class counts; union derived later as pred + label - inter ----
    # (MXU-offload of these lane reductions was skipped: with the reduction
    #  along lanes the ones-vector RHS would need a (TP, 1) layout, which is
    #  pathologically padded in VMEM; XLU reductions are the cheaper path here.)
    inter_acc[...] = inter_acc[...] + jnp.sum(
        (pred_mat & onehot).astype(jnp.float32), axis=1, keepdims=True)
    pred_acc[...] = pred_acc[...] + jnp.sum(
        pred_mat.astype(jnp.float32), axis=1, keepdims=True)
    label_acc[...] = label_acc[...] + jnp.sum(
        onehot.astype(jnp.float32), axis=1, keepdims=True)

    @pl.when(i == pl.num_programs(1) - 1)
    def _finalize():
        out_ref[0:num_classes, :] = inter_acc[...]
        out_ref[num_classes:2 * num_classes, :] = pred_acc[...]
        out_ref[2 * num_classes:3 * num_classes, :] = label_acc[...]
        out_ref[3 * num_classes:3 * num_classes + 1, :] = ce_acc[...]


def _pick_tile(num_classes, hw):
    """Largest lane-multiple pixel tile keeping a (C, tile) f32 temp <= 2 MiB."""
    cap = (2 * 1024 * 1024) // (4 * max(num_classes, 1))
    cap = max(512, min(65536, (cap // 512) * 512))
    hw_pad = -(-hw // 128) * 128
    return int(min(cap, hw_pad))


def ce_dice_loss(logits_nchw, target_nhw):
    N, C, H, W = logits_nchw.shape
    HW = H * W
    P = N * HW

    # Pure reshapes: no HBM transpose, no dtype up-cast of the logits.
    x3 = logits_nchw.reshape(N, C, HW)
    t3 = target_nhw.reshape(N, 1, HW).astype(jnp.int32)

    tile = _pick_tile(C, HW)
    n_tiles = -(-HW // tile)

    kernel = functools.partial(_ce_dice_kernel, num_classes=C, hw=HW)
    partials = pl.pallas_call(
        kernel,
        out_shape=jax.ShapeDtypeStruct((N, 3 * C + 1, 1), jnp.float32),
        grid_spec=pltpu.PrefetchScalarGridSpec(
            num_scalar_prefetch=0,
            grid=(N, n_tiles),
            in_specs=[
                pl.BlockSpec((None, C, tile), lambda n, i: (n, 0, i)),
                pl.BlockSpec((None, 1, tile), lambda n, i: (n, 0, i)),
            ],
            out_specs=pl.BlockSpec((None, 3 * C + 1, 1), lambda n, i: (n, 0, 0)),
            scratch_shapes=[
                pltpu.VMEM((C, 1), jnp.float32),   # intersection per class
                pltpu.VMEM((C, 1), jnp.float32),   # predicted-count per class
                pltpu.VMEM((C, 1), jnp.float32),   # label-count per class
                pltpu.VMEM((1, 1), jnp.float32),   # cross-entropy sum
            ],
        ),
        compiler_params=pltpu.CompilerParams(
            dimension_semantics=("parallel", "arbitrary"),
            vmem_limit_bytes=32 * 1024 * 1024,
        ),
    )(x3, t3)

    # Tiny finalize in plain JAX (works with the per-batch / per-core partials).
    s = jnp.sum(partials[:, :, 0], axis=0)        # (3C+1,)
    inter = s[0:C]
    pred_cnt = s[C:2 * C]
    present = s[2 * C:3 * C]
    ce_sum = s[3 * C]
    union = pred_cnt + present - inter
    present_mask = present > 0.0
    num_valid = jnp.sum(present_mask.astype(jnp.float32))
    iou = jnp.sum(jnp.where(present_mask, inter / jnp.maximum(union, 1.0), 0.0))
    return ce_sum / float(P) + iou / num_valid


def _reference(logits_nchw, target_nhw):
    """Plain-JAX reference of the (intended) PyTorch forward."""
    N, C, H, W = logits_nchw.shape
    logp = jax.nn.log_softmax(logits_nchw.astype(jnp.float32), axis=1)
    tgt = target_nhw.astype(jnp.int32)
    picked = jnp.take_along_axis(logp, tgt[:, None, :, :], axis=1)[:, 0]
    ce = -jnp.mean(picked)
    pred = jnp.argmax(logits_nchw, axis=1)
    iou = 0.0
    num_valid = 0.0
    for c in range(C):
        pred_c = pred == c
        label_c = tgt == c
        present = jnp.sum(label_c) > 0
        inter = jnp.sum(pred_c & label_c).astype(jnp.float32)
        union = jnp.sum(pred_c | label_c).astype(jnp.float32)
        iou = iou + jnp.where(present, inter / jnp.maximum(union, 1.0), 0.0)
        num_valid = num_valid + jnp.where(present, 1.0, 0.0)
    return ce + iou / num_valid


if __name__ == "__main__":
    key = jax.random.PRNGKey(0)
    kx, kt = jax.random.split(key)
    N, C, H, W = 2, 4, 16, 16
    x = jax.random.normal(kx, (N, C, H, W), dtype=jnp.float32)
    t = jax.random.randint(kt, (N, H, W), 0, C, dtype=jnp.int32)

    loss = ce_dice_loss(x, t)
    loss = jax.block_until_ready(loss)

    ref = _reference(x, t)
    assert jnp.allclose(loss, ref, rtol=1e-5, atol=1e-5), (loss, ref)
    print("KERNEL_OK")
</pallas_src>

<mosaic_0001>
module attributes {stable_mosaic.version = 11 : i64} {
  func.func @_ce_dice_kernel(%arg0: i32, %arg1: i32, %arg2: memref<1x4x256xf32, #tpu.memory_space<vmem>>, %arg3: memref<1x1x256xi32, #tpu.memory_space<vmem>>, %arg4: memref<1x13x1xf32, #tpu.memory_space<vmem>>, %arg5: memref<4x1xf32, #tpu.memory_space<vmem>>, %arg6: memref<4x1xf32, #tpu.memory_space<vmem>>, %arg7: memref<4x1xf32, #tpu.memory_space<vmem>>, %arg8: memref<1x1xf32, #tpu.memory_space<vmem>>) attributes {dimension_semantics = [#tpu.dimension_semantics<parallel>, #tpu.dimension_semantics<arbitrary>], iteration_bounds = array<i64: 2, 1>, scalar_prefetch = 0 : i64, scratch_operands = 4 : i64, tpu.core_type = #tpu.core_type<tc>, window_params = [{transform_indices = @transform_0, window_bounds = array<i64: 1, 4, 256>}, {transform_indices = @transform_1, window_bounds = array<i64: 1, 1, 256>}, {transform_indices = @transform_2, window_bounds = array<i64: 1, 13, 1>}]} {
    %c0_i32 = arith.constant 0 : i32
    %0 = arith.cmpi eq, %arg1, %c0_i32 : i32
    %1 = arith.extui %0 : i1 to i32
    %c0_i32_0 = arith.constant 0 : i32
    %2 = arith.cmpi ne, %1, %c0_i32_0 : i32
    scf.if %2 {
      %cst_35 = arith.constant 0.000000e+00 : f32
      %76 = vector.broadcast %cst_35 : f32 to vector<4x1xf32>
      %c0_36 = arith.constant 0 : index
      %c0_37 = arith.constant 0 : index
      %77 = vector.load %arg5[%c0_36, %c0_37] : memref<4x1xf32, #tpu.memory_space<vmem>>, vector<4x1xf32>
      tpu.vector_store %arg5[%c0_36, %c0_37], %76 {strides = array<i32>} : memref<4x1xf32, #tpu.memory_space<vmem>>, vector<4x1xf32>,
      %cst_38 = arith.constant 0.000000e+00 : f32
      %78 = vector.broadcast %cst_38 : f32 to vector<4x1xf32>
      %c0_39 = arith.constant 0 : index
      %c0_40 = arith.constant 0 : index
      %79 = vector.load %arg6[%c0_39, %c0_40] : memref<4x1xf32, #tpu.memory_space<vmem>>, vector<4x1xf32>
      tpu.vector_store %arg6[%c0_39, %c0_40], %78 {strides = array<i32>} : memref<4x1xf32, #tpu.memory_space<vmem>>, vector<4x1xf32>,
      %cst_41 = arith.constant 0.000000e+00 : f32
      %80 = vector.broadcast %cst_41 : f32 to vector<4x1xf32>
      %c0_42 = arith.constant 0 : index
      %c0_43 = arith.constant 0 : index
      %81 = vector.load %arg7[%c0_42, %c0_43] : memref<4x1xf32, #tpu.memory_space<vmem>>, vector<4x1xf32>
      tpu.vector_store %arg7[%c0_42, %c0_43], %80 {strides = array<i32>} : memref<4x1xf32, #tpu.memory_space<vmem>>, vector<4x1xf32>,
      %cst_44 = arith.constant 0.000000e+00 : f32
      %82 = vector.broadcast %cst_44 : f32 to vector<1x1xf32>
      %c0_45 = arith.constant 0 : index
      %c0_46 = arith.constant 0 : index
      %83 = vector.load %arg8[%c0_45, %c0_46] : memref<1x1xf32, #tpu.memory_space<vmem>>, vector<1x1xf32>
      tpu.vector_store %arg8[%c0_45, %c0_46], %82 {strides = array<i32>} : memref<1x1xf32, #tpu.memory_space<vmem>>, vector<1x1xf32>,
    } else {
    }
    %c0 = arith.constant 0 : index
    %c0_1 = arith.constant 0 : index
    %c0_2 = arith.constant 0 : index
    %3 = vector.load %arg2[%c0, %c0_1, %c0_2] : memref<1x4x256xf32, #tpu.memory_space<vmem>>, vector<1x4x256xf32>
    %4 = vector.shape_cast %3 : vector<1x4x256xf32> to vector<4x256xf32>
    %c0_3 = arith.constant 0 : index
    %c0_4 = arith.constant 0 : index
    %c0_5 = arith.constant 0 : index
    %5 = vector.load %arg3[%c0_3, %c0_4, %c0_5] : memref<1x1x256xi32, #tpu.memory_space<vmem>>, vector<1x1x256xi32>
    %6 = vector.shape_cast %5 : vector<1x1x256xi32> to vector<1x256xi32>
    %7 = tpu.iota {dimensions = array<i32: 0>} : vector<4x256xi32>
    %8 = tpu.iota {dimensions = array<i32: 1>} : vector<1x256xi32>
    %c256_i32 = arith.constant 256 : i32
    %9 = arith.muli %arg1, %c256_i32 : i32
    %10 = vector.broadcast %9 : i32 to vector<1x256xi32>
    %11 = arith.addi %8, %10 : vector<1x256xi32>
    %c256_i32_6 = arith.constant 256 : i32
    %12 = vector.broadcast %c256_i32_6 : i32 to vector<1x256xi32>
    %13 = arith.cmpi slt, %11, %12 : vector<1x256xi32>
    %cst = arith.constant dense<0xFF800000> : vector<256xf32>
    %14 = vector.multi_reduction <maximumf>, %4, %cst [0] : vector<4x256xf32> to vector<256xf32>
    %15 = vector.shape_cast %14 : vector<256xf32> to vector<1x256xf32>
    %16 = vector.broadcast %15 : vector<1x256xf32> to vector<4x256xf32>
    %17 = arith.subf %4, %16 : vector<4x256xf32>
    %18 = math.exp %17 : vector<4x256xf32>
    %cst_7 = arith.constant dense<0.000000e+00> : vector<256xf32>
    %19 = vector.multi_reduction <add>, %18, %cst_7 [0] : vector<4x256xf32> to vector<256xf32>
    %20 = vector.shape_cast %19 : vector<256xf32> to vector<1x256xf32>
    %21 = math.log %20 : vector<1x256xf32>
    %c-1_i32 = arith.constant -1 : i32
    %22 = vector.broadcast %c-1_i32 : i32 to vector<1x256xi32>
    %23 = arith.select %13, %6, %22 : vector<1x256xi1>, vector<1x256xi32>
    %24 = vector.broadcast %23 : vector<1x256xi32> to vector<4x256xi32>
    %25 = arith.cmpi eq, %7, %24 : vector<4x256xi32>
    %cst_8 = arith.constant 0.000000e+00 : f32
    %26 = vector.broadcast %cst_8 : f32 to vector<4x256xf32>
    %27 = arith.select %25, %17, %26 : vector<4x256xi1>, vector<4x256xf32>
    %cst_9 = arith.constant dense<0.000000e+00> : vector<256xf32>
    %28 = vector.multi_reduction <add>, %27, %cst_9 [0] : vector<4x256xf32> to vector<256xf32>
    %29 = vector.shape_cast %28 : vector<256xf32> to vector<1x256xf32>
    %30 = arith.subf %21, %29 : vector<1x256xf32>
    %cst_10 = arith.constant 0.000000e+00 : f32
    %31 = vector.broadcast %cst_10 : f32 to vector<1x256xf32>
    %32 = arith.select %13, %30, %31 : vector<1x256xi1>, vector<1x256xf32>
    %c0_11 = arith.constant 0 : index
    %c0_12 = arith.constant 0 : index
    %33 = vector.load %arg8[%c0_11, %c0_12] : memref<1x1xf32, #tpu.memory_space<vmem>>, vector<1x1xf32>
    %34 = vector.shape_cast %32 : vector<1x256xf32> to vector<1x1x256xf32>
    %cst_13 = arith.constant dense<0.000000e+00> : vector<1xf32>
    %35 = vector.multi_reduction <add>, %34, %cst_13 [1, 2] : vector<1x1x256xf32> to vector<1xf32>
    %36 = vector.shape_cast %35 : vector<1xf32> to vector<1x1x1xf32>
    %37 = vector.extract %36[0, 0, 0] : f32 from vector<1x1x1xf32>
    %38 = vector.broadcast %37 : f32 to vector<1x1xf32>
    %39 = arith.addf %33, %38 : vector<1x1xf32>
    %c0_14 = arith.constant 0 : index
    %c0_15 = arith.constant 0 : index
    %40 = vector.load %arg8[%c0_14, %c0_15] : memref<1x1xf32, #tpu.memory_space<vmem>>, vector<1x1xf32>
    tpu.vector_store %arg8[%c0_14, %c0_15], %39 {strides = array<i32>} : memref<1x1xf32, #tpu.memory_space<vmem>>, vector<1x1xf32>,
    %41 = vector.broadcast %15 : vector<1x256xf32> to vector<4x256xf32>
    %42 = arith.cmpf oeq, %4, %41 : vector<4x256xf32>
    %c4_i32 = arith.constant 4 : i32
    %43 = vector.broadcast %c4_i32 : i32 to vector<4x256xi32>
    %44 = arith.select %42, %7, %43 : vector<4x256xi1>, vector<4x256xi32>
    %cst_16 = arith.constant dense<2147483647> : vector<256xi32>
    %45 = vector.multi_reduction <minsi>, %44, %cst_16 [0] : vector<4x256xi32> to vector<256xi32>
    %46 = vector.shape_cast %45 : vector<256xi32> to vector<1x256xi32>
    %c-1_i32_17 = arith.constant -1 : i32
    %47 = vector.broadcast %c-1_i32_17 : i32 to vector<1x256xi32>
    %48 = arith.select %13, %46, %47 : vector<1x256xi1>, vector<1x256xi32>
    %49 = vector.broadcast %48 : vector<1x256xi32> to vector<4x256xi32>
    %50 = arith.cmpi eq, %7, %49 : vector<4x256xi32>
    %c0_18 = arith.constant 0 : index
    %c0_19 = arith.constant 0 : index
    %51 = vector.load %arg5[%c0_18, %c0_19] : memref<4x1xf32, #tpu.memory_space<vmem>>, vector<4x1xf32>
    %52 = arith.andi %50, %25 : vector<4x256xi1>
    %53 = arith.extui %52 : vector<4x256xi1> to vector<4x256xi32>
    %54 = arith.sitofp %53 : vector<4x256xi32> to vector<4x256xf32>
    %cst_20 = arith.constant dense<0.000000e+00> : vector<4xf32>
    %55 = vector.multi_reduction <add>, %54, %cst_20 [1] : vector<4x256xf32> to vector<4xf32>
    %56 = vector.shape_cast %55 : vector<4xf32> to vector<4x1xf32>
    %57 = arith.addf %51, %56 : vector<4x1xf32>
    %c0_21 = arith.constant 0 : index
    %c0_22 = arith.constant 0 : index
    %58 = vector.load %arg5[%c0_21, %c0_22] : memref<4x1xf32, #tpu.memory_space<vmem>>, vector<4x1xf32>
    tpu.vector_store %arg5[%c0_21, %c0_22], %57 {strides = array<i32>} : memref<4x1xf32, #tpu.memory_space<vmem>>, vector<4x1xf32>,
    %c0_23 = arith.constant 0 : index
    %c0_24 = arith.constant 0 : index
    %59 = vector.load %arg6[%c0_23, %c0_24] : memref<4x1xf32, #tpu.memory_space<vmem>>, vector<4x1xf32>
    %60 = arith.extui %50 : vector<4x256xi1> to vector<4x256xi32>
    %61 = arith.sitofp %60 : vector<4x256xi32> to vector<4x256xf32>
    %cst_25 = arith.constant dense<0.000000e+00> : vector<4xf32>
    %62 = vector.multi_reduction <add>, %61, %cst_25 [1] : vector<4x256xf32> to vector<4xf32>
    %63 = vector.shape_cast %62 : vector<4xf32> to vector<4x1xf32>
    %64 = arith.addf %59, %63 : vector<4x1xf32>
    %c0_26 = arith.constant 0 : index
    %c0_27 = arith.constant 0 : index
    %65 = vector.load %arg6[%c0_26, %c0_27] : memref<4x1xf32, #tpu.memory_space<vmem>>, vector<4x1xf32>
    tpu.vector_store %arg6[%c0_26, %c0_27], %64 {strides = array<i32>} : memref<4x1xf32, #tpu.memory_space<vmem>>, vector<4x1xf32>,
    %c0_28 = arith.constant 0 : index
    %c0_29 = arith.constant 0 : index
    %66 = vector.load %arg7[%c0_28, %c0_29] : memref<4x1xf32, #tpu.memory_space<vmem>>, vector<4x1xf32>
    %67 = arith.extui %25 : vector<4x256xi1> to vector<4x256xi32>
    %68 = arith.sitofp %67 : vector<4x256xi32> to vector<4x256xf32>
    %cst_30 = arith.constant dense<0.000000e+00> : vector<4xf32>
    %69 = vector.multi_reduction <add>, %68, %cst_30 [1] : vector<4x256xf32> to vector<4xf32>
    %70 = vector.shape_cast %69 : vector<4xf32> to vector<4x1xf32>
    %71 = arith.addf %66, %70 : vector<4x1xf32>
    %c0_31 = arith.constant 0 : index
    %c0_32 = arith.constant 0 : index
    %72 = vector.load %arg7[%c0_31, %c0_32] : memref<4x1xf32, #tpu.memory_space<vmem>>, vector<4x1xf32>
    tpu.vector_store %arg7[%c0_31, %c0_32], %71 {strides = array<i32>} : memref<4x1xf32, #tpu.memory_space<vmem>>, vector<4x1xf32>,
    %c0_i32_33 = arith.constant 0 : i32
    %73 = arith.cmpi eq, %arg1, %c0_i32_33 : i32
    %74 = arith.extui %73 : i1 to i32
    %c0_i32_34 = arith.constant 0 : i32
    %75 = arith.cmpi ne, %74, %c0_i32_34 : i32
    scf.if %75 {
      %c0_35 = arith.constant 0 : index
      %c0_36 = arith.constant 0 : index
      %76 = vector.load %arg5[%c0_35, %c0_36] : memref<4x1xf32, #tpu.memory_space<vmem>>, vector<4x1xf32>
      %c0_37 = arith.constant 0 : index
      %c0_38 = arith.constant 0 : index
      %c0_39 = arith.constant 0 : index
      %77 = vector.load %arg4[%c0_37, %c0_38, %c0_39] : memref<1x13x1xf32, #tpu.memory_space<vmem>>, vector<1x4x1xf32>
      %78 = vector.shape_cast %77 : vector<1x4x1xf32> to vector<4x1xf32>
      %79 = vector.shape_cast %76 : vector<4x1xf32> to vector<1x4x1xf32>
      tpu.vector_store %arg4[%c0_37, %c0_38, %c0_39], %79 {strides = array<i32>} : memref<1x13x1xf32, #tpu.memory_space<vmem>>, vector<1x4x1xf32>,
      %c0_40 = arith.constant 0 : index
      %c0_41 = arith.constant 0 : index
      %80 = vector.load %arg6[%c0_40, %c0_41] : memref<4x1xf32, #tpu.memory_space<vmem>>, vector<4x1xf32>
      %c0_42 = arith.constant 0 : index
      %c4 = arith.constant 4 : index
      %c0_43 = arith.constant 0 : index
      %81 = vector.load %arg4[%c0_42, %c4, %c0_43] : memref<1x13x1xf32, #tpu.memory_space<vmem>>, vector<1x4x1xf32>
      %82 = vector.shape_cast %81 : vector<1x4x1xf32> to vector<4x1xf32>
      %83 = vector.shape_cast %80 : vector<4x1xf32> to vector<1x4x1xf32>
      tpu.vector_store %arg4[%c0_42, %c4, %c0_43], %83 {strides = array<i32>} : memref<1x13x1xf32, #tpu.memory_space<vmem>>, vector<1x4x1xf32>,
      %c0_44 = arith.constant 0 : index
      %c0_45 = arith.constant 0 : index
      %84 = vector.load %arg7[%c0_44, %c0_45] : memref<4x1xf32, #tpu.memory_space<vmem>>, vector<4x1xf32>
      %c0_46 = arith.constant 0 : index
      %c8 = arith.constant 8 : index
      %c0_47 = arith.constant 0 : index
      %85 = vector.load %arg4[%c0_46, %c8, %c0_47] : memref<1x13x1xf32, #tpu.memory_space<vmem>>, vector<1x4x1xf32>
      %86 = vector.shape_cast %85 : vector<1x4x1xf32> to vector<4x1xf32>
      %87 = vector.shape_cast %84 : vector<4x1xf32> to vector<1x4x1xf32>
      tpu.vector_store %arg4[%c0_46, %c8, %c0_47], %87 {strides = array<i32>} : memref<1x13x1xf32, #tpu.memory_space<vmem>>, vector<1x4x1xf32>,
      %c0_48 = arith.constant 0 : index
      %c0_49 = arith.constant 0 : index
      %88 = vector.load %arg8[%c0_48, %c0_49] : memref<1x1xf32, #tpu.memory_space<vmem>>, vector<1x1xf32>
      %c0_50 = arith.constant 0 : index
      %c12 = arith.constant 12 : index
      %c0_51 = arith.constant 0 : index
      %89 = vector.load %arg4[%c0_50, %c12, %c0_51] : memref<1x13x1xf32, #tpu.memory_space<vmem>>, vector<1x1x1xf32>
      %90 = vector.shape_cast %89 : vector<1x1x1xf32> to vector<1x1xf32>
      %91 = vector.shape_cast %88 : vector<1x1xf32> to vector<1x1x1xf32>
      tpu.vector_store %arg4[%c0_50, %c12, %c0_51], %91 {strides = array<i32>} : memref<1x13x1xf32, #tpu.memory_space<vmem>>, vector<1x1x1xf32>,
    } else {
    }
    return
  }
  func.func @transform_0(%arg0: i32, %arg1: i32) -> (i32, i32, i32) {
    %c0_i32 = arith.constant 0 : i32
    %c0_i32_0 = arith.constant 0 : i32
    return %arg0, %c0_i32, %arg1 : i32, i32, i32
  }
  func.func @transform_1(%arg0: i32, %arg1: i32) -> (i32, i32, i32) {
    %c0_i32 = arith.constant 0 : i32
    %c0_i32_0 = arith.constant 0 : i32
    return %arg0, %c0_i32, %arg1 : i32, i32, i32
  }
  func.func @transform_2(%arg0: i32, %arg1: i32) -> (i32, i32, i32) {
    %c0_i32 = arith.constant 0 : i32
    %c0_i32_0 = arith.constant 0 : i32
    %c0_i32_1 = arith.constant 0 : i32
    return %arg0, %c0_i32, %c0_i32_0 : i32, i32, i32
  }
}

</mosaic_0001>

<llo_original>
// kernel: tpu_custom_call.1
$region0: #{tpu_custom_call.1}
  #allocation0 [shape = 'u32[]', space=smem, size = 0x4, offset = 0x4, fixed_abs, tag = 'smem constant byte address 0x4 - core index']
  #allocation1 [shape = 'u32[144,128]{1,0:T(1,128)}', space=vmem, size = 0x12000, scoped, tag = 'internal scratch']
  #allocation2 [shape = 'f32[4,1]{1,0:T(4,128)}', space=vmem, size = 0x800, scoped, tag = 'scratch operand']
  #allocation3 [shape = 'f32[4,1]{1,0:T(4,128)}', space=vmem, size = 0x800, scoped, tag = 'scratch operand']
  #allocation4 [shape = 'f32[4,1]{1,0:T(4,128)}', space=vmem, size = 0x800, scoped, tag = 'scratch operand']
  #allocation5 [shape = 'f32[1,1]{1,0:T(1,128)}', space=vmem, size = 0x200, scoped, tag = 'scratch operand']
  %s0 = inlined_call_operand.hbm [shape: f32[2,4,256], index: 0, kind: input, shape index: {}]
  %s1 = inlined_call_operand.hbm [shape: s32[2,1,256], index: 1, kind: input, shape index: {}]
  %s2 = inlined_call_operand.vmem [shape: f32[2,13,1], index: 2, kind: output, shape index: {}]
  %s3 = sld [smem:[#allocation0]]
  $region57: #{tpu_custom_call.1} parent=0
    _
  %s5 = ssub.s32 1, %s3
  %s6 = scalar_select 0, %s5, %s3
  $region1: #{tpu_custom_call.1} parent=0
    #allocation6 [shape = 'u8[8192]{0}', space=vmem, size = 0x2000, scoped, tag = 'input window, operand 0']
    #allocation7 [shape = 's32[2]{0}', space=sflag, size = 0x8, scoped, tag = 'scoped memory for tpu_custom_call.1']
    #allocation8 [shape = 'u8[2048]{0}', space=vmem, size = 0x800, scoped, tag = 'input window, operand 1']
    #allocation9 [shape = 's32[2]{0}', space=sflag, size = 0x8, scoped, tag = 'scoped memory for tpu_custom_call.1']
    %7 = vsyncpa [#allocation7], 0
    %s8 = scalar_lea.sflag [#allocation7], 1
    %9 = vsyncpa %s8, 0
    %10 = vsyncpa [#allocation9], 0
    %s11 = scalar_lea.sflag [#allocation9], 1
    %12 = vsyncpa %s11, 0
    loop: start=0, step=1, limit=4
    $region2: #{tpu_custom_call.1} parent=1 // loop_pre_header
      _
    $region3: #{tpu_custom_call.1} parent=1 // loop_header
      %s14 = sphi 0, %s18
      %p15 = scmp.ge.s32.totalorder %s14, 4
      %s21 = sphi 0, %s33
      %s22 = sphi 0, %s29
      %s23 = sphi 0, %s21
      %s24 = sphi 0, %s22
      %s25 = sphi 0, %s23
      %s26 = sphi 0, %s24
      %s38 = sphi 0, %s40
      %s41 = sphi 0, %s38
      %s42 = sphi 0, %s41
      %s58 = sphi 0, %s42
      %s66 = sphi 0, %s68
      %s69 = sphi 0, %s66
      %s70 = sphi 0, %s69
      %s86 = sphi 0, %s70
      %s92 = sphi 0, %s94
      %s95 = sphi 0, %s92
      %s96 = sphi 0, %s95
      %s112 = sphi 0, %s96
    $region4: #{tpu_custom_call.1} parent=1 // loop_header_branch
      %17 = sbr.rel (%p15) target = $region8
    $region5: #{tpu_custom_call.1} parent=1 // loop_body
      %s19 = ssub.s32 %s14, 1
      %s20 = ssub.s32 %s14, 2
      %s27 = sadd.s32 1, %s22
      %p28 = scmp.ge.s32.totalorder %s27, 1
      %s29 = scalar_select %p28, 0, %s27
      %s30 = sadd.s32 1, %s21
      %s31 = scalar_select %p28, %s30, %s21
      %p32 = scmp.ge.s32.totalorder %s31, 2
      %s33 = scalar_select %p32, 0, %s31
      %s34 = ssub.s32 %s21, %s33
      %s35 = ssub.s32 %s22, %s29
      %s36 = sor.u32 %s34, %s35
      %p37 = scmp.eq.s32.totalorder %s36, 0
      %s39 = sadd.s32 %s38, 1
      %s40 = scalar_select %p37, %s38, %s39
      %p43 = pneg %p37
      %p44 = scmp.eq.s32.totalorder %s14, 1
      %p45 = por %p43, %p44
      %p46 = scmp.ne.s32.totalorder %s38, %s41
      %p47 = scmp.eq.s32.totalorder %s14, 0
      %p48 = por %p46, %p47
      %p49 = scmp.ne.s32.totalorder %s38, %s41
      %p50 = scmp.eq.s32.totalorder %s19, 1
      %p51 = por %p49, %p50
      %p52 = scmp.ne.s32.totalorder %s41, %s42
      %p53 = scmp.eq.s32.totalorder %s19, 0
      %p54 = por %p52, %p53
      %p55 = scmp.ne.s32.totalorder %s41, %s42
      %p56 = scmp.eq.s32.totalorder %s20, 1
      %p57 = por %p55, %p56
      %p59 = scmp.ne.s32.totalorder %s42, %s58
      %p60 = scmp.eq.s32.totalorder %s20, 0
      %p61 = por %p59, %p60
      %s62 = ssub.s32 %s21, %s33
      %s63 = ssub.s32 %s22, %s29
      %s64 = sor.u32 %s62, %s63
      %p65 = scmp.eq.s32.totalorder %s64, 0
      %s67 = sadd.s32 %s66, 1
      %s68 = scalar_select %p65, %s66, %s67
      %p71 = pneg %p65
      %p72 = scmp.eq.s32.totalorder %s14, 1
      %p73 = por %p71, %p72
      %p74 = scmp.ne.s32.totalorder %s66, %s69
      %p75 = scmp.eq.s32.totalorder %s14, 0
      %p76 = por %p74, %p75
      %p77 = scmp.ne.s32.totalorder %s66, %s69
      %p78 = scmp.eq.s32.totalorder %s19, 1
      %p79 = por %p77, %p78
      %p80 = scmp.ne.s32.totalorder %s69, %s70
      %p81 = scmp.eq.s32.totalorder %s19, 0
      %p82 = por %p80, %p81
      %p83 = scmp.ne.s32.totalorder %s69, %s70
      %p84 = scmp.eq.s32.totalorder %s20, 1
      %p85 = por %p83, %p84
      %p87 = scmp.ne.s32.totalorder %s70, %s86
      %p88 = scmp.eq.s32.totalorder %s20, 0
      %p89 = por %p87, %p88
      %s90 = ssub.s32 %s21, %s33
      %p91 = scmp.eq.s32.totalorder %s90, 0
      %s93 = sadd.s32 %s92, 1
      %s94 = scalar_select %p91, %s92, %s93
      %p97 = pneg %p91
      %p98 = scmp.eq.s32.totalorder %s14, 1
      %p99 = por %p97, %p98
      %p100 = scmp.ne.s32.totalorder %s92, %s95
      %p101 = scmp.eq.s32.totalorder %s14, 0
      %p102 = por %p100, %p101
      %p103 = scmp.ne.s32.totalorder %s92, %s95
      %p104 = scmp.eq.s32.totalorder %s19, 1
      %p105 = por %p103, %p104
      %p106 = scmp.ne.s32.totalorder %s95, %s96
      %p107 = scmp.eq.s32.totalorder %s19, 0
      %p108 = por %p106, %p107
      %p109 = scmp.ne.s32.totalorder %s95, %s96
      %p110 = scmp.eq.s32.totalorder %s20, 1
      %p111 = por %p109, %p110
      %p113 = scmp.ne.s32.totalorder %s96, %s112
      %p114 = scmp.eq.s32.totalorder %s20, 0
      %p115 = por %p113, %p114
      %p116 = scmp.le.s32.totalorder 1, %s14
      %p117 = scmp.lt.s32.totalorder %s14, 3
      %p118 = pnand %p116, %p117
      %p119 = pneg %p118
      // Predicated region
      $region9: #{tpu_custom_call.1} parent=5 // pred_check
        _
      $region10: #{tpu_custom_call.1} parent=5 // pred_check_branch
        %121 = sbr.rel (%p118) target = $region12
      $region11: #{tpu_custom_call.1} parent=5 // pred_region
        %s122 = ssub.s32 %s14, 1
      $region12: #{tpu_custom_call.1} parent=5 // pred_fallthru
        _
      %p123 = scmp.lt.s32.totalorder %s14, 2
      // Predicated region
      $region13: #{tpu_custom_call.1} parent=5 // pred_check
        %p124 = pneg %p123
      $region14: #{tpu_custom_call.1} parent=5 // pred_check_branch
        %126 = sbr.rel (%p124) target = $region16
      $region15: #{tpu_custom_call.1} parent=5 // pred_region
        // Predicated region
        $region17: #{tpu_custom_call.1} parent=15 // pred_check
          %p127 = pneg %p48
        $region18: #{tpu_custom_call.1} parent=15 // pred_check_branch
          %129 = sbr.rel (%p127) target = $region20
        $region19: #{tpu_custom_call.1} parent=15 // pred_region
          %s130 = sand.u32 %s38, 1
          %s131 = scalar_lea.sflag [#allocation7], %s130
          %s132 = sand.u32 %s38, 1
          %s133 = smul.addr %s132, 8
          %s134 = scalar_lea.vmem [#allocation6], %s133
          %s135 = smul.u32 2, %s22
          %s137 = ssub.s32 128, 128
          %138 = vsyncadd %s131, %s137
          %s139 = smul.addr %s21, 2
          %s140 = sadd.s32 %s135, %s139
          %s141 = smul.addr %s140, 64
          %s142 = scalar_lea.hbm %s0, %s141
          %s144 = sshll.u32 %s134, 4
          %s145 = int_to_ptr.vmem [resolvable:$true] %s144
          %147 = dma.hbm_to_vmem [thread:$0]  %s142, 128, %s145, %s131
        $region20: #{tpu_custom_call.1} parent=15 // pred_fallthru
          _
        // Predicated region
        $region21: #{tpu_custom_call.1} parent=15 // pred_check
          %p148 = pneg %p76
        $region22: #{tpu_custom_call.1} parent=15 // pred_check_branch
          %150 = sbr.rel (%p148) target = $region24
        $region23: #{tpu_custom_call.1} parent=15 // pred_region
          %s151 = sand.u32 %s66, 1
          %s152 = scalar_lea.sflag [#allocation9], %s151
          %s153 = sand.u32 %s66, 1
          %s154 = smul.addr %s153, 2
          %s155 = scalar_lea.vmem [#allocation8], %s154
          %s156 = smul.u32 2, %s22
          %s158 = ssub.s32 32, 32
          %159 = vsyncadd %s152, %s158
          %s160 = smul.addr %s21, 2
          %s161 = sadd.s32 %s156, %s160
          %s162 = smul.addr %s161, 16
          %s163 = scalar_lea.hbm %s1, %s162
          %s165 = sshll.u32 %s155, 4
          %s166 = int_to_ptr.vmem [resolvable:$true] %s165
          %168 = dma.hbm_to_vmem [thread:$0]  %s163, 32, %s166, %s152
        $region24: #{tpu_custom_call.1} parent=15 // pred_fallthru
          _
      $region16: #{tpu_custom_call.1} parent=5 // pred_fallthru
        _
      %p169 = scmp.le.s32.totalorder 1, %s14
      %p170 = scmp.lt.s32.totalorder %s14, 3
      %p171 = pnand %p169, %p170
      %p172 = pneg %p171
      // Predicated region
      $region25: #{tpu_custom_call.1} parent=5 // pred_check
        _
      $region26: #{tpu_custom_call.1} parent=5 // pred_check_branch
        %174 = sbr.rel (%p171) target = $region28
      $region27: #{tpu_custom_call.1} parent=5 // pred_region
        %s175 = ssub.s32 %s14, 1
        %s176 = sand.u32 %s41, 1
        %s177 = scalar_lea.sflag [#allocation7], %s176
        %s178 = sand.u32 %s41, 1
        %s179 = smul.addr %s178, 8
        %s180 = scalar_lea.vmem [#allocation6], %s179
        // Predicated region
        $region29: #{tpu_custom_call.1} parent=27 // pred_check
          %p181 = pneg %p54
        $region30: #{tpu_custom_call.1} parent=27 // pred_check_branch
          %183 = sbr.rel (%p181) target = $region32
        $region31: #{tpu_custom_call.1} parent=27 // pred_region
          %184 = dma.done %s177, 128
        $region32: #{tpu_custom_call.1} parent=27 // pred_fallthru
          _
        %s185 = sand.u32 %s69, 1
        %s186 = scalar_lea.sflag [#allocation9], %s185
        %s187 = sand.u32 %s69, 1
        %s188 = smul.addr %s187, 2
        %s189 = scalar_lea.vmem [#allocation8], %s188
        // Predicated region
        $region33: #{tpu_custom_call.1} parent=27 // pred_check
          %p190 = pneg %p82
        $region34: #{tpu_custom_call.1} parent=27 // pred_check_branch
          %192 = sbr.rel (%p190) target = $region36
        $region35: #{tpu_custom_call.1} parent=27 // pred_region
          %193 = dma.done %s186, 32
        $region36: #{tpu_custom_call.1} parent=27 // pred_fallthru
          _
        %s194 = sand.u32 %s41, 1
        %s195 = scalar_lea.sflag [#allocation7], %s194
        %s196 = sand.u32 %s41, 1
        %s197 = smul.addr %s196, 8
        %s198 = scalar_lea.vmem [#allocation6], %s197
        %p199 = pneg %p54
        %p200 = pneg %p51
        %s201 = sand.u32 %s69, 1
        %s202 = scalar_lea.sflag [#allocation9], %s201
        %s203 = sand.u32 %s69, 1
        %s204 = smul.addr %s203, 2
        %s205 = scalar_lea.vmem [#allocation8], %s204
        %p206 = pneg %p82
        %p207 = pneg %p79
        %p208 = pneg %p108
        %p209 = pneg %p105
        %p210 = scmp.lt.s32.totalorder %s23, 1
        %s211 = scalar_select %p210, %s23, 1
        %s212 = smul.addr %s211, 2
        %s213 = smul.addr %s212, 8
        %s214 = scalar_lea.vmem %s2, %s213
        %s215 = smul.u32 2, %s24
        %s216 = smul.u32 2, %s24
        %p217 = scmp.lt.s32.totalorder %s23, 1
        %s218 = scalar_select %p217, %s23, 1
        %s219 = smul.addr %s218, 2
        %s220 = smul.addr %s219, 8
        %s221 = scalar_lea.vmem %s2, %s220
        %p222 = scmp.eq.s32.totalorder %s24, 0
        // Predicated region
        $region37: #{tpu_custom_call.1} parent=27 // pred_check
          %p223 = pneg %p222
        $region38: #{tpu_custom_call.1} parent=27 // pred_check_branch
          %225 = sbr.rel (%p223) target = $region40
        $region39: #{tpu_custom_call.1} parent=27 // pred_region
          %vm226 = vcmask 3072
          %227 = vst.msk [vmem:[#allocation2] sm:$0xf] %vm226, 0.0
          %228 = vst.msk [vmem:[#allocation3] sm:$0xf] %vm226, 0.0
          %229 = vst.msk [vmem:[#allocation4] sm:$0xf] %vm226, 0.0
          %vm230 = vcmask 0
          %231 = vst.msk [vmem:[#allocation5] sm:$0x1] %vm230, 0.0
        $region40: #{tpu_custom_call.1} parent=27 // pred_fallthru
          _
        %v232 = vld [vmem:[%s180] sm:$0xff]
        %v233 = vld [vmem:[%s189] sm:$0x3]
        %v234 = vlaneseq
        %v235 = vshrl.u32 %v234, 7
        %v236 = vlaneseq
        %v237 = vand.u32 %v236, 127
        %v238 = vadd.s32 %v237, 128
        %s239 = smul.u32 %s24, 256
        %v240 = vstv %s239
        %v241 = vadd.s32 %v237, %v240
        %v242 = vadd.s32 %v238, %v240
        %vm243 = vcmp.lt.s32.totalorder %v241, 256
        %vm244 = vcmp.lt.s32.totalorder %v242, 256
        %v246 = vcombine.high %v232, %v232
        %vm248 = vcmask 1043456
        %v249 = vsel %vm248, %v232, -inf
        %v250 = vrot.slane %v249, 4
        %v251 = vmax.f32 %v249, %v250
        %v252 = vrot.slane %v251, 2
        %v253 = vmax.f32 %v251, %v252
        %v254 = vrot.slane %v253, 1
        %v255 = vmax.f32 %v253, %v254
        %v256 = vsel %vm248, %v246, -inf
        %v257 = vrot.slane %v256, 4
        %v258 = vmax.f32 %v256, %v257
        %v259 = vrot.slane %v258, 2
        %v260 = vmax.f32 %v258, %v259
        %v261 = vrot.slane %v260, 1
        %v262 = vmax.f32 %v260, %v261
        %v265 = vcombine.low %v255, %v262
        %v267 = vsub.f32 %v232, %v265
        %v268 = vmul.f32 %v267, 1.442695
        %v269 = vpow.pop %v268
        %v271 = vcombine.high %v269, %v269
        %v273 = vsel %vm248, %v269, 0.0
        %v274 = vrot.slane %v273, 4
        %v275 = vadd.f32 %v273, %v274
        %v276 = vrot.slane %v275, 2
        %v277 = vadd.f32 %v275, %v276
        %v278 = vrot.slane %v277, 1
        %v279 = vadd.f32 %v277, %v278
        %v280 = vsel %vm248, %v271, 0.0
        %v281 = vrot.slane %v280, 4
        %v282 = vadd.f32 %v280, %v281
        %v283 = vrot.slane %v282, 2
        %v284 = vadd.f32 %v282, %v283
        %v285 = vrot.slane %v284, 1
        %v286 = vadd.f32 %v284, %v285
        %v287 = vlog2.pop %v279
        %v288 = vmul.f32 %v287, 0.6931472
        %v289 = vlog2.pop %v286
        %v290 = vmul.f32 %v289, 0.6931472
        %v291 = vlaneseq
        %v292 = vshrl.u32 %v291, 7
        %v293 = vsub.s32 0, %v292
        %v294 = vrot.slane %v233, %v293
        %v295 = vlaneseq
        %v296 = vshrl.u32 %v295, 7
        %v297 = vsub.s32 1, %v296
        %v298 = vrot.slane %v233, %v297
        %v299 = vsel %vm243, %v294, 4294967295
        %v300 = vsel %vm244, %v298, 4294967295
        %v301 = vlaneseq
        %v302 = vshrl.u32 %v301, 7
        %v303 = vsub.s32 0, %v302
        %v304 = vrot.slane %v299, %v303
        %v305 = vlaneseq
        %v306 = vshrl.u32 %v305, 7
        %v307 = vsub.s32 0, %v306
        %v308 = vrot.slane %v300, %v307
        %vm309 = vcmp.eq.s32.totalorder %v235, %v304
        %vm310 = vcmp.eq.s32.totalorder %v235, %v308
        %v312 = vcombine.high %v267, %v267
        %v314 = vsel %vm309, %v267, 0.0
        %v315 = vsel %vm310, %v312, 0.0
        %v316 = vsel %vm248, %v314, 0.0
        %v317 = vrot.slane %v316, 4
        %v318 = vadd.f32 %v316, %v317
        %v319 = vrot.slane %v318, 2
        %v320 = vadd.f32 %v318, %v319
        %v321 = vrot.slane %v320, 1
        %v322 = vadd.f32 %v320, %v321
        %v323 = vsel %vm248, %v315, 0.0
        %v324 = vrot.slane %v323, 4
        %v325 = vadd.f32 %v323, %v324
        %v326 = vrot.slane %v325, 2
        %v327 = vadd.f32 %v325, %v326
        %v328 = vrot.slane %v327, 1
        %v329 = vadd.f32 %v327, %v328
        %v330 = vsub.f32 %v288, %v322
        %v331 = vsub.f32 %v290, %v329
        %v332 = vsel %vm243, %v330, 0.0
        %v333 = vsel %vm244, %v331, 0.0
        %v334 = vld [vmem:[#allocation5] sm:$0x1]
        %vm335 = vcmask 1040384
        %v336 = vsel %vm335, %v332, 0.0
        %v337 = vsel %vm335, %v333, 0.0
        %v338 = vadd.f32 %v336, %v337
        %339 = vadd.xlane.f32.xlu0 %v338
        %v340 = vpop.xlane.xlu0 %339
        %v341 = vrot.slane %v340, 4
        %v342 = vadd.f32 %v340, %v341
        %v343 = vrot.slane %v342, 2
        %v344 = vadd.f32 %v342, %v343
        %v345 = vrot.slane %v344, 1
        %v346 = vadd.f32 %v344, %v345
        %s347 = vtos %v346
        %v348 = vstv %s347
        %v349 = vadd.f32 %v334, %v348
        %vm350 = vcmask 0
        %351 = vst.msk [vmem:[#allocation5] sm:$0x1] %vm350, %v349
        %vm352 = vcmp.eq.f32.partialorder %v232, %v265
        %v354 = vunpack.c.l.s4 839922192
        %v355 = vunpack.c.0.s8 %v354
        %v356 = vlaneseq
        %v357 = vshrl.u32 %v356, 7
        %v358 = vsub.s32 %v355, %v357
        %v359 = vrot.slane %v235, %v358
        %v360 = vsel %vm352, %v359, 4
        %v361 = vcombine.high %v360, %v360
        %v362 = vsel %vm248, %v360, 2147483647
        %v363 = vrot.slane %v362, 4
        %vm364 = vcmp.lt.s32.totalorder %v362, %v363
        %v365 = vsel %vm364, %v362, %v363
        %v366 = vrot.slane %v365, 2
        %vm367 = vcmp.lt.s32.totalorder %v365, %v366
        %v368 = vsel %vm367, %v365, %v366
        %v369 = vrot.slane %v368, 1
        %vm370 = vcmp.lt.s32.totalorder %v368, %v369
        %v371 = vsel %vm370, %v368, %v369
        %v372 = vsel %vm248, %v361, 2147483647
        %v373 = vrot.slane %v372, 4
        %vm374 = vcmp.lt.s32.totalorder %v372, %v373
        %v375 = vsel %vm374, %v372, %v373
        %v376 = vrot.slane %v375, 2
        %vm377 = vcmp.lt.s32.totalorder %v375, %v376
        %v378 = vsel %vm377, %v375, %v376
        %v379 = vrot.slane %v378, 1
        %vm380 = vcmp.lt.s32.totalorder %v378, %v379
        %v381 = vsel %vm380, %v378, %v379
        %v382 = vsel %vm243, %v371, 4294967295
        %v383 = vsel %vm244, %v381, 4294967295
        %vm384 = vcmp.eq.s32.totalorder %v235, %v382
        %vm385 = vcmp.eq.s32.totalorder %v235, %v383
        %v386 = vld [vmem:[#allocation2] sm:$0xf]
        %vm387 = vmand %vm384, %vm309
        %vm388 = vmand %vm385, %vm310
        %v389 = vsel %vm387, 1, 0
        %v390 = vsel %vm388, 1, 0
        %v391 = vcvt.s32.f32 %v389
        %v392 = vcvt.s32.f32 %v390
        %v393 = vsel %vm248, %v391, 0.0
        %v394 = vsel %vm248, %v392, 0.0
        %v395 = vadd.f32 %v393, %v394
        %396 = vadd.xlane.f32.xlu0 %v395
        %v397 = vpop.xlane.xlu0 %396
        %v398 = vadd.f32 %v386, %v397
        %vm399 = vcmask 3072
        %400 = vst.msk [vmem:[#allocation2] sm:$0xf] %vm399, %v398
        %v401 = vld [vmem:[#allocation3] sm:$0xf]
        %v402 = vsel %vm384, 1, 0
        %v403 = vsel %vm385, 1, 0
        %v404 = vcvt.s32.f32 %v402
        %v405 = vcvt.s32.f32 %v403
        %v406 = vsel %vm248, %v404, 0.0
        %v407 = vsel %vm248, %v405, 0.0
        %v408 = vadd.f32 %v406, %v407
        %409 = vadd.xlane.f32.xlu0 %v408
        %v410 = vpop.xlane.xlu0 %409
        %v411 = vadd.f32 %v401, %v410
        %412 = vst.msk [vmem:[#allocation3] sm:$0xf] %vm399, %v411
        %v413 = vld [vmem:[#allocation4] sm:$0xf]
        %v414 = vsel %vm309, 1, 0
        %v415 = vsel %vm310, 1, 0
        %v416 = vcvt.s32.f32 %v414
        %v417 = vcvt.s32.f32 %v415
        %v418 = vsel %vm248, %v416, 0.0
        %v419 = vsel %vm248, %v417, 0.0
        %v420 = vadd.f32 %v418, %v419
        %421 = vadd.xlane.f32.xlu0 %v420
        %v422 = vpop.xlane.xlu0 %421
        %v423 = vadd.f32 %v413, %v422
        %424 = vst.msk [vmem:[#allocation4] sm:$0xf] %vm399, %v423
        // Predicated region
        $region41: #{tpu_custom_call.1} parent=27 // pred_check
          %p425 = pneg %p222
        $region42: #{tpu_custom_call.1} parent=27 // pred_check_branch
          %427 = sbr.rel (%p425) target = $region44
        $region43: #{tpu_custom_call.1} parent=27 // pred_region
          %v428 = vld [vmem:[#allocation2] sm:$0xf]
          %429 = vst.msk [vmem:[%s221] sm:$0xf] %vm399, %v428
          %v430 = vld [vmem:[#allocation3] sm:$0xf]
          %431 = vst.msk [vmem:[%s221 + $0x4] sm:$0xf] %vm399, %v430
          %v432 = vld [vmem:[#allocation4] sm:$0xf]
          %433 = vst.msk [vmem:[%s221 + $0x8] sm:$0xf] %vm399, %v432
          %v434 = vld [vmem:[#allocation5] sm:$0x1]
          %435 = vst.msk [vmem:[%s221 + $0xc] sm:$0x1] %vm350, %v434
        $region44: #{tpu_custom_call.1} parent=27 // pred_fallthru
          _
        %p436 = scmp.lt.s32.totalorder %s23, 1
        %s437 = scalar_select %p436, %s23, 1
        %s438 = smul.addr %s437, 2
        %s439 = smul.addr %s438, 8
        %s440 = scalar_lea.vmem %s2, %s439
        // Predicated region
        $region45: #{tpu_custom_call.1} parent=27 // pred_check
          %p441 = pneg %p105
        $region46: #{tpu_custom_call.1} parent=27 // pred_check_branch
          %443 = sbr.rel (%p441) target = $region48
        $region47: #{tpu_custom_call.1} parent=27 // pred_region
          _
        $region48: #{tpu_custom_call.1} parent=27 // pred_fallthru
          _
      $region28: #{tpu_custom_call.1} parent=5 // pred_fallthru
        _
      %p444 = scmp.le.s32.totalorder 2, %s14
      // Predicated region
      $region49: #{tpu_custom_call.1} parent=5 // pred_check
        %p445 = pneg %p444
      $region50: #{tpu_custom_call.1} parent=5 // pred_check_branch
        %447 = sbr.rel (%p445) target = $region52
      $region51: #{tpu_custom_call.1} parent=5 // pred_region
        %s448 = ssub.s32 %s14, 2
        // Predicated region
        $region53: #{tpu_custom_call.1} parent=51 // pred_check
          %p449 = pneg %p111
        $region54: #{tpu_custom_call.1} parent=51 // pred_check_branch
          %451 = sbr.rel (%p449) target = $region56
        $region55: #{tpu_custom_call.1} parent=51 // pred_region
          %p452 = scmp.lt.s32.totalorder %s25, 1
          %s453 = scalar_select %p452, %s25, 1
          %s454 = smul.addr %s453, 2
          %s455 = smul.addr %s454, 8
          %s456 = scalar_lea.vmem %s2, %s455
        $region56: #{tpu_custom_call.1} parent=51 // pred_fallthru
          _
      $region52: #{tpu_custom_call.1} parent=5 // pred_fallthru
        _
    $region6: #{tpu_custom_call.1} parent=1 // loop_footer
      %s18 = sadd.s32 1, %s14
    $region7: #{tpu_custom_call.1} parent=1 // loop_footer_branch
      %13 = sbr.rel target = $region3
    $region8: #{tpu_custom_call.1} parent=1 // loop_exit
      _
    %457 = vsyncpa [#allocation7], 1
    %s458 = scalar_lea.sflag [#allocation7], 1
    %459 = vsyncpa %s458, 1
    %460 = vsyncpa [#allocation9], 1
    %s461 = scalar_lea.sflag [#allocation9], 1
    %462 = vsyncpa %s461, 1

</llo_original>
